<compile_context>
chip_gen: v6e
topology: v6e:2x2x1
jax: 0.10.0
libtpu: 0.0.40
codegen_flags: <defaults>
</compile_context>

<pallas_src>
import functools

import jax
import jax.numpy as jnp
from jax.experimental import pallas as pl
from jax.experimental.pallas import tpu as pltpu


NEGATIVE_SLOPE = 1e-8
_BN_CAP = 16  # max batch images folded into one grid step (static unroll)


def _conv1x1_bias_leakyrelu_kernel(x_ref, w_ref, b_ref, o_ref, *, bn):
    """Fused 1x1 conv (as matmul) + bias + LeakyReLU on an NCHW tile.

    x_ref: (BN, C_in, HW_TILE)   activations (lanes = spatial positions)
    w_ref: (C_out, C_in)         conv weight (resident, constant index map)
    b_ref: (C_out, 1)            bias (f32, broadcasts over the lane axis)
    o_ref: (BN, C_out, HW_TILE)  output tile
    """
    w = w_ref[...]
    b = b_ref[...]
    # bn is small and static: independent per-image matmuls, each result is
    # stored immediately so live ranges stay short.
    for i in range(bn):
        acc = jnp.dot(w, x_ref[i], preferred_element_type=jnp.float32)
        acc = acc + b
        out = jnp.where(acc >= 0.0, acc, acc * NEGATIVE_SLOPE)
        o_ref[i] = out.astype(o_ref.dtype)


@functools.lru_cache(maxsize=1)
def _chip_params():
    """Generation-aware per-step HBM-bytes target and VMEM budgets."""
    kind = ""
    try:
        kind = jax.devices()[0].device_kind.lower()
    except Exception:
        pass

    if "v7" in kind or "7x" in kind:
        vmem_phys = 64 * 1024 * 1024            # per-TensorCore on v7x
        step_bytes = 3 * 1024 * 1024            # ~3.2 TB/s per TC
        is_v7 = True
    elif "v6" in kind:
        vmem_phys = 128 * 1024 * 1024
        step_bytes = 3 * 1024 * 1024 // 2       # ~1.4 TB/s
        is_v7 = False
    elif "v5" in kind:
        vmem_phys = 128 * 1024 * 1024
        step_bytes = 3 * 1024 * 1024 // 4       # ~0.8 TB/s (don't exceed 16 MiB scoped default without raising it)
        is_v7 = False
    else:
        # Unknown generation: ask the runtime, fall back to conservative numbers.
        try:
            vmem_phys = int(pltpu.get_tpu_info().vmem_capacity_bytes)
        except Exception:
            vmem_phys = 64 * 1024 * 1024
        vmem_phys = max(32 * 1024 * 1024, min(vmem_phys, 128 * 1024 * 1024))
        step_bytes = 3 * 1024 * 1024 // 2
        is_v7 = False

    # Scoped-VMEM limit we request from Mosaic (headroom below physical);
    # tile sizing uses half of it to cover Mosaic's own accounting/scratch.
    vmem_limit = min((vmem_phys * 3) // 4, 96 * 1024 * 1024)
    sizing_budget = vmem_limit // 2
    return step_bytes, sizing_budget, vmem_limit, is_v7


def _round_up(x, m):
    return ((x + m - 1) // m) * m


def _pick_tiling(n, hw, c_in, c_out, dtype_bytes, step_bytes_target,
                 vmem_budget, is_v7):
    """Choose (BN, hw_tile): batch images folded per step, lane tile over H*W."""
    # HBM traffic per lane per image: read C_in, write C_out.
    hbm_per_lane = (c_in + c_out) * dtype_bytes
    # VMEM per lane per image: double-buffered in/out blocks + f32 acc / where.
    vmem_per_lane = 2 * (c_in + c_out) * dtype_bytes + 2 * c_out * 4

    lanes = min(step_bytes_target // hbm_per_lane, vmem_budget // vmem_per_lane)
    lanes = max(128, (lanes // 128) * 128)

    hw_block_full = _round_up(hw, 128) if hw > 128 else hw

    if hw >= lanes:
        # Spatial extent alone provides enough bytes per step.
        bn = 1
        hw_tile = min(lanes, hw_block_full)
    else:
        # Small spatial: take the whole H*W and fold batch images per step.
        hw_tile = hw_block_full
        bn = max(1, min(n, _BN_CAP, lanes // max(hw_tile, 1)))

    # v7x has 2 TensorCores: a 1-step grid idles one of them.  Split when the
    # work is big enough for the extra per-step overhead to pay off.
    if is_v7:
        num_steps = (-(-n // bn)) * (-(-hw // hw_tile))
        step_bytes = bn * hw_tile * hbm_per_lane
        if num_steps == 1 and step_bytes >= 512 * 1024:
            if bn >= 2:
                bn = -(-bn // 2)
            elif hw_tile >= 256:
                hw_tile = _round_up(-(-hw_tile // 2), 128)

    return bn, hw_tile


@functools.partial(jax.jit, static_argnames=("stride",))
def conv_bn_relu(x, weight, bias, *, stride=1):
    """Forward pass of ConvBNRelu (1x1 conv, stride s, no padding, LeakyReLU).

    Args:
      x:      (N, C_in, H, W)     float32 / bf16 (NCHW, PyTorch convention)
      weight: (C_out, C_in, 1, 1) conv weight (PyTorch layout)
      bias:   (C_out,)            conv bias
      stride: conv stride

    Returns:
      (N, C_out, H_out, W_out) with the same dtype as x.
    """
    n, c_in, h, w = x.shape
    c_out = weight.shape[0]

    # 1x1 conv with stride s and no padding == spatial subsampling.
    # TODO(synk): fuse the stride subsample into the kernel (strided in-kernel
    # loads) to avoid this extra XLA HBM pass when stride > 1.
    if stride != 1:
        x = x[:, :, ::stride, ::stride]
    h_out, w_out = x.shape[2], x.shape[3]
    hw = h_out * w_out

    # NCHW -> (N, C_in, H*W): a pure reshape, no data movement.
    x3d = x.reshape(n, c_in, hw)
    w2d = weight.reshape(c_out, c_in).astype(x.dtype)
    b2d = bias.reshape(c_out, 1).astype(jnp.float32)

    dtype_bytes = jnp.dtype(x.dtype).itemsize
    step_bytes_target, vmem_budget, vmem_limit, is_v7 = _chip_params()
    bn, hw_tile = _pick_tiling(n, hw, c_in, c_out, dtype_bytes,
                               step_bytes_target, vmem_budget, is_v7)
    num_b = pl.cdiv(n, bn)
    num_hw = pl.cdiv(hw, hw_tile)

    cost = pl.CostEstimate(
        flops=2 * n * hw * c_in * c_out,
        transcendentals=0,
        bytes_accessed=n * hw * (c_in + c_out) * dtype_bytes
        + (c_out * c_in + c_out) * dtype_bytes,
    )

    kernel = functools.partial(_conv1x1_bias_leakyrelu_kernel, bn=bn)

    out3d = pl.pallas_call(
        kernel,
        out_shape=jax.ShapeDtypeStruct((n, c_out, hw), x.dtype),
        grid=(num_b, num_hw),
        in_specs=[
            # Activations: BN images folded per step, channels on sublanes,
            # H*W on lanes (lane-dense, unmasked for hw_tile multiples of 128).
            pl.BlockSpec((bn, c_in, hw_tile), lambda i, t: (i, 0, t)),
            # Weight / bias: constant index map -> DMA'd once, stay resident.
            pl.BlockSpec((c_out, c_in), lambda i, t: (0, 0)),
            pl.BlockSpec((c_out, 1), lambda i, t: (0, 0)),
        ],
        out_specs=pl.BlockSpec((bn, c_out, hw_tile), lambda i, t: (i, 0, t)),
        compiler_params=pltpu.CompilerParams(
            dimension_semantics=("parallel", "parallel"),
            vmem_limit_bytes=vmem_limit,
        ),
        cost_estimate=cost,
    )(x3d, w2d, b2d)

    # (N, C_out, H*W) -> NCHW, again a free reshape.
    return out3d.reshape(n, c_out, h_out, w_out)


def reference(x, weight, bias, stride=1):
    """Pure-JAX reference for correctness checking."""
    if stride != 1:
        x = x[:, :, ::stride, ::stride]
    w2d = weight.reshape(weight.shape[0], weight.shape[1])       # (C_out, C_in)
    y = jnp.einsum("nchw,oc->nohw", x, w2d) + bias[None, :, None, None]
    return jnp.where(y >= 0.0, y, y * NEGATIVE_SLOPE)


if __name__ == "__main__":
    key = jax.random.PRNGKey(0)
    kx, kw, kb = jax.random.split(key, 3)

    batch, c_in, c_out, spatial = 2, 4, 8, 16

    x = jax.random.normal(kx, (batch, c_in, spatial, spatial), jnp.float32)
    # Deterministic parameter init (shapes match nn.Conv2d(c_in, c_out, 1)).
    bound = 1.0 / (c_in ** 0.5)
    weight = jax.random.uniform(kw, (c_out, c_in, 1, 1), jnp.float32,
                                minval=-bound, maxval=bound)
    bias = jax.random.uniform(kb, (c_out,), jnp.float32,
                              minval=-bound, maxval=bound)

    for stride in (1, 2):
        out = conv_bn_relu(x, weight, bias, stride=stride)
        out = jax.block_until_ready(out)
        ref = reference(x, weight, bias, stride=stride)
        assert out.shape == ref.shape, (stride, out.shape, ref.shape)
        assert jnp.allclose(out, ref, atol=1e-5, rtol=1e-5), stride

    print("KERNEL_OK")
</pallas_src>

<mosaic_0001>
module attributes {stable_mosaic.version = 11 : i64} {
  func.func @_conv1x1_bias_leakyrelu_kernel(%arg0: i32, %arg1: i32, %arg2: memref<2x4x256xf32, #tpu.memory_space<vmem>>, %arg3: memref<8x4xf32, #tpu.memory_space<vmem>>, %arg4: memref<8x1xf32, #tpu.memory_space<vmem>>, %arg5: memref<2x8x256xf32, #tpu.memory_space<vmem>>) attributes {dimension_semantics = [#tpu.dimension_semantics<parallel>, #tpu.dimension_semantics<parallel>], iteration_bounds = array<i64: 1, 1>, scalar_prefetch = 0 : i64, scratch_operands = 0 : i64, tpu.core_type = #tpu.core_type<tc>, window_params = [{transform_indices = @transform_0, window_bounds = array<i64: 2, 4, 256>}, {pipeline_mode = #tpu.pipeline_mode<synchronous>, transform_indices = @transform_1, window_bounds = array<i64: 8, 4>}, {pipeline_mode = #tpu.pipeline_mode<synchronous>, transform_indices = @transform_2, window_bounds = array<i64: 8, 1>}, {transform_indices = @transform_3, window_bounds = array<i64: 2, 8, 256>}]} {
    %c0 = arith.constant 0 : index
    %c0_0 = arith.constant 0 : index
    %0 = vector.load %arg3[%c0, %c0_0] : memref<8x4xf32, #tpu.memory_space<vmem>>, vector<8x4xf32>
    %c0_1 = arith.constant 0 : index
    %c0_2 = arith.constant 0 : index
    %1 = vector.load %arg4[%c0_1, %c0_2] : memref<8x1xf32, #tpu.memory_space<vmem>>, vector<8x1xf32>
    %c0_3 = arith.constant 0 : index
    %c0_4 = arith.constant 0 : index
    %c0_5 = arith.constant 0 : index
    %2 = vector.load %arg2[%c0_3, %c0_4, %c0_5] : memref<2x4x256xf32, #tpu.memory_space<vmem>>, vector<1x4x256xf32>
    %3 = vector.shape_cast %2 : vector<1x4x256xf32> to vector<4x256xf32>
    %cst = arith.constant dense<0.000000e+00> : vector<8x256xf32>
    %4 = tpu.matmul %0, %3, %cst {dimension_numbers = #tpu.dot_dimension_numbers<[1], [0], [0], [1], [0, 0, 1, 1], [], []>} : vector<8x4xf32>, vector<4x256xf32>, vector<8x256xf32> -> vector<8x256xf32>
    %5 = vector.broadcast %1 : vector<8x1xf32> to vector<8x256xf32>
    %6 = arith.addf %4, %5 : vector<8x256xf32>
    %cst_6 = arith.constant 0.000000e+00 : f32
    %7 = vector.broadcast %cst_6 : f32 to vector<8x256xf32>
    %8 = arith.cmpf oge, %6, %7 : vector<8x256xf32>
    %cst_7 = arith.constant 9.99999993E-9 : f32
    %9 = vector.broadcast %cst_7 : f32 to vector<8x256xf32>
    %10 = arith.mulf %6, %9 : vector<8x256xf32>
    %11 = arith.select %8, %6, %10 : vector<8x256xi1>, vector<8x256xf32>
    %c0_8 = arith.constant 0 : index
    %c0_9 = arith.constant 0 : index
    %c0_10 = arith.constant 0 : index
    %12 = vector.load %arg5[%c0_8, %c0_9, %c0_10] : memref<2x8x256xf32, #tpu.memory_space<vmem>>, vector<1x8x256xf32>
    %13 = vector.shape_cast %12 : vector<1x8x256xf32> to vector<8x256xf32>
    %14 = vector.shape_cast %11 : vector<8x256xf32> to vector<1x8x256xf32>
    tpu.vector_store %arg5[%c0_8, %c0_9, %c0_10], %14 {strides = array<i32>} : memref<2x8x256xf32, #tpu.memory_space<vmem>>, vector<1x8x256xf32>,
    %c1 = arith.constant 1 : index
    %c0_11 = arith.constant 0 : index
    %c0_12 = arith.constant 0 : index
    %15 = vector.load %arg2[%c1, %c0_11, %c0_12] : memref<2x4x256xf32, #tpu.memory_space<vmem>>, vector<1x4x256xf32>
    %16 = vector.shape_cast %15 : vector<1x4x256xf32> to vector<4x256xf32>
    %cst_13 = arith.constant dense<0.000000e+00> : vector<8x256xf32>
    %17 = tpu.matmul %0, %16, %cst_13 {dimension_numbers = #tpu.dot_dimension_numbers<[1], [0], [0], [1], [0, 0, 1, 1], [], []>} : vector<8x4xf32>, vector<4x256xf32>, vector<8x256xf32> -> vector<8x256xf32>
    %18 = vector.broadcast %1 : vector<8x1xf32> to vector<8x256xf32>
    %19 = arith.addf %17, %18 : vector<8x256xf32>
    %cst_14 = arith.constant 0.000000e+00 : f32
    %20 = vector.broadcast %cst_14 : f32 to vector<8x256xf32>
    %21 = arith.cmpf oge, %19, %20 : vector<8x256xf32>
    %cst_15 = arith.constant 9.99999993E-9 : f32
    %22 = vector.broadcast %cst_15 : f32 to vector<8x256xf32>
    %23 = arith.mulf %19, %22 : vector<8x256xf32>
    %24 = arith.select %21, %19, %23 : vector<8x256xi1>, vector<8x256xf32>
    %c1_16 = arith.constant 1 : index
    %c0_17 = arith.constant 0 : index
    %c0_18 = arith.constant 0 : index
    %25 = vector.load %arg5[%c1_16, %c0_17, %c0_18] : memref<2x8x256xf32, #tpu.memory_space<vmem>>, vector<1x8x256xf32>
    %26 = vector.shape_cast %25 : vector<1x8x256xf32> to vector<8x256xf32>
    %27 = vector.shape_cast %24 : vector<8x256xf32> to vector<1x8x256xf32>
    tpu.vector_store %arg5[%c1_16, %c0_17, %c0_18], %27 {strides = array<i32>} : memref<2x8x256xf32, #tpu.memory_space<vmem>>, vector<1x8x256xf32>,
    return
  }
  func.func @transform_0(%arg0: i32, %arg1: i32) -> (i32, i32, i32) {
    %c0_i32 = arith.constant 0 : i32
    %c0_i32_0 = arith.constant 0 : i32
    return %arg0, %c0_i32, %arg1 : i32, i32, i32
  }
  func.func @transform_1(%arg0: i32, %arg1: i32) -> (i32, i32) {
    %c0_i32 = arith.constant 0 : i32
    %c0_i32_0 = arith.constant 0 : i32
    %c0_i32_1 = arith.constant 0 : i32
    return %c0_i32, %c0_i32_0 : i32, i32
  }
  func.func @transform_2(%arg0: i32, %arg1: i32) -> (i32, i32) {
    %c0_i32 = arith.constant 0 : i32
    %c0_i32_0 = arith.constant 0 : i32
    %c0_i32_1 = arith.constant 0 : i32
    return %c0_i32, %c0_i32_0 : i32, i32
  }
  func.func @transform_3(%arg0: i32, %arg1: i32) -> (i32, i32, i32) {
    %c0_i32 = arith.constant 0 : i32
    %c0_i32_0 = arith.constant 0 : i32
    return %arg0, %c0_i32, %arg1 : i32, i32, i32
  }
}

</mosaic_0001>

<llo_original>
// kernel: conv_bn_relu.1
$region0: #{conv_bn_relu.1}
  #allocation0 [shape = 'u32[]', space=smem, size = 0x4, offset = 0x4, fixed_abs, tag = 'smem constant byte address 0x4 - core index']
  #allocation1 [shape = 'u32[144,128]{1,0:T(1,128)}', space=vmem, size = 0x12000, scoped, tag = 'internal scratch']
  %s0 = inlined_call_operand.vmem [shape: f32[2,4,256], index: 0, kind: input, shape index: {}]
  %s1 = inlined_call_operand.vmem [shape: f32[8,4], index: 1, kind: input, shape index: {}]
  %s2 = inlined_call_operand.vmem [shape: f32[8,1], index: 2, kind: input, shape index: {}]
  %s3 = inlined_call_operand.vmem [shape: f32[2,8,256], index: 3, kind: output, shape index: {}]
  %s4 = sld [smem:[#allocation0]]
  $region22: #{conv_bn_relu.1} parent=0
    _
  %s6 = ssub.s32 1, %s4
  %s7 = scalar_select 0, %s6, %s4
  // Predicated region
  $region2: #{conv_bn_relu.1} parent=0 // pred_check
    _
  $region3: #{conv_bn_relu.1} parent=0 // pred_check_branch
    %9 = sbr.rel (0) target = $region5
  $region4: #{conv_bn_relu.1} parent=0 // pred_region
    _
  $region5: #{conv_bn_relu.1} parent=0 // pred_fallthru
    _
  // Predicated region
  $region6: #{conv_bn_relu.1} parent=0 // pred_check
    _
  $region7: #{conv_bn_relu.1} parent=0 // pred_check_branch
    %11 = sbr.rel (0) target = $region9
  $region8: #{conv_bn_relu.1} parent=0 // pred_region
    _
  $region9: #{conv_bn_relu.1} parent=0 // pred_fallthru
    _
  // Predicated region
  $region10: #{conv_bn_relu.1} parent=0 // pred_check
    _
  $region11: #{conv_bn_relu.1} parent=0 // pred_check_branch
    %13 = sbr.rel (0) target = $region13
  $region12: #{conv_bn_relu.1} parent=0 // pred_region
    _
  $region13: #{conv_bn_relu.1} parent=0 // pred_fallthru
    _
  %v14 = vld [vmem:[%s1] sm:$0xff]
  %v15 = vld [vmem:[%s2] sm:$0xff]
  %v16 = vld [vmem:[%s0] sm:$0xff]
  %18 = vset.pattern.permute.xlu0 0
  %19 = vperm.xlu0 %18, %v15
  %v20 = vpop.permute.xlu0 %19
  %v23 = vcombine.high %v16, %v16
  %vm24 = vcmask 31744
  %v26 = vsel %vm24, %v14, 0
  %vm28 = vcmask 1043456
  %v29 = vsel %vm28, %v16, 0
  %v31 = vsel %vm28, %v23, 0
  %33 = vmatprep.subr.mxu0 0.0
  %34 = vmatpush1.msra.mxu0 0.0
  %35 = vmatprep.subr.mxu0 0.0
  %36 = vmatpush1.msra.mxu0 0.0
  %37 = vmatprep.subr.mxu0 0.0
  %38 = vmatpush1.msra.mxu0 0.0
  %39 = vmatprep.subr.mxu0 0.0
  %40 = vmatpush1.msra.mxu0 0.0
  %41 = vmatprep.subr.mxu0 0.0
  %42 = vmatpush1.msra.mxu0 0.0
  %43 = vmatprep.subr.mxu0 0.0
  %44 = vmatpush1.msra.mxu0 0.0
  %45 = vmatprep.subr.mxu0 0.0
  %46 = vmatpush1.msra.mxu0 0.0
  %47 = vmatprep.subr.mxu0 0.0
  %48 = vmatpush1.msra.mxu0 0.0
  %49 = vmatprep.subr.mxu0 0.0
  %50 = vmatpush1.msra.mxu0 0.0
  %51 = vmatprep.subr.mxu0 0.0
  %52 = vmatpush1.msra.mxu0 0.0
  %53 = vmatprep.subr.mxu0 0.0
  %54 = vmatpush1.msra.mxu0 0.0
  %55 = vmatprep.subr.mxu0 0.0
  %56 = vmatpush1.msra.mxu0 0.0
  %57 = vmatprep.subr.mxu0 0.0
  %58 = vmatpush1.msra.mxu0 0.0
  %59 = vmatprep.subr.mxu0 0.0
  %60 = vmatpush1.msra.mxu0 0.0
  %61 = vmatprep.subr.mxu0 0.0
  %62 = vmatpush1.msra.mxu0 0.0
  %63 = vmatprep.subr.mxu0 %v31
  %64 = vmatpush1.msra.mxu0 %v29
  %65 = vmatprep.subr.mxu0 0.0
  %66 = vmatpush2.msra.mxu0 0.0
  %67 = vmatprep.subr.mxu0 0.0
  %68 = vmatpush2.msra.mxu0 0.0
  %69 = vmatprep.subr.mxu0 0.0
  %70 = vmatpush2.msra.mxu0 0.0
  %71 = vmatprep.subr.mxu0 0.0
  %72 = vmatpush2.msra.mxu0 0.0
  %73 = vmatprep.subr.mxu0 0.0
  %74 = vmatpush2.msra.mxu0 0.0
  %75 = vmatprep.subr.mxu0 0.0
  %76 = vmatpush2.msra.mxu0 0.0
  %77 = vmatprep.subr.mxu0 0.0
  %78 = vmatpush2.msra.mxu0 0.0
  %79 = vmatprep.subr.mxu0 0.0
  %80 = vmatpush2.msra.mxu0 0.0
  %81 = vmatprep.subr.mxu0 0.0
  %82 = vmatpush2.msra.mxu0 0.0
  %83 = vmatprep.subr.mxu0 0.0
  %84 = vmatpush2.msra.mxu0 0.0
  %85 = vmatprep.subr.mxu0 0.0
  %86 = vmatpush2.msra.mxu0 0.0
  %87 = vmatprep.subr.mxu0 0.0
  %88 = vmatpush2.msra.mxu0 0.0
  %89 = vmatprep.subr.mxu0 0.0
  %90 = vmatpush2.msra.mxu0 0.0
  %91 = vmatprep.subr.mxu0 0.0
  %92 = vmatpush2.msra.mxu0 0.0
  %93 = vmatprep.subr.mxu0 0.0
  %94 = vmatpush2.msra.mxu0 0.0
  %95 = vmatprep.subr.mxu0 0.0
  %96 = vmatpush2.msra.mxu0 0.0
  %97 = vmatprep.mubr.f32.mxu0 0.0
  %98 = vmatmul.mubr.f32.gmra.mxu0 %v26
  %v99 = vpop.f32.mrf.mxu0
  %v100 = vadd.f32 %v20, %v99
  %v101 = vpop.f32.mrf.mxu0
  %v102 = vadd.f32 %v20, %v101
  %103 = vdwg.mxu0
  %vm104 = vcmp.ge.f32.partialorder %v100, 0.0
  %vm105 = vcmp.ge.f32.partialorder %v102, 0.0
  %v106 = vmul.f32 %v100, 1e-08
  %v107 = vmul.f32 %v102, 1e-08
  %v108 = vsel %vm104, %v100, %v106
  %v109 = vsel %vm105, %v102, %v107
  %110 = vst [vmem:[%s3] sm:$0xff] %v108
  %111 = vst [vmem:[%s3 + $0x8] sm:$0xff] %v109
  %s112 = scalar_lea.vmem %s0, 8
  %v113 = vld [vmem:[%s112] sm:$0xff]
  %v115 = vcombine.high %v113, %v113
  %v116 = vsel %vm28, %v113, 0
  %v118 = vsel %vm28, %v115, 0
  %120 = vmatprep.subr.mxu0 0.0
  %121 = vmatpush1.msra.mxu0 0.0
  %122 = vmatprep.subr.mxu0 0.0
  %123 = vmatpush1.msra.mxu0 0.0
  %124 = vmatprep.subr.mxu0 0.0
  %125 = vmatpush1.msra.mxu0 0.0
  %126 = vmatprep.subr.mxu0 0.0
  %127 = vmatpush1.msra.mxu0 0.0
  %128 = vmatprep.subr.mxu0 0.0
  %129 = vmatpush1.msra.mxu0 0.0
  %130 = vmatprep.subr.mxu0 0.0
  %131 = vmatpush1.msra.mxu0 0.0
  %132 = vmatprep.subr.mxu0 0.0
  %133 = vmatpush1.msra.mxu0 0.0
  %134 = vmatprep.subr.mxu0 0.0
  %135 = vmatpush1.msra.mxu0 0.0
  %136 = vmatprep.subr.mxu0 0.0
  %137 = vmatpush1.msra.mxu0 0.0
  %138 = vmatprep.subr.mxu0 0.0
  %139 = vmatpush1.msra.mxu0 0.0
  %140 = vmatprep.subr.mxu0 0.0
  %141 = vmatpush1.msra.mxu0 0.0
  %142 = vmatprep.subr.mxu0 0.0
  %143 = vmatpush1.msra.mxu0 0.0
  %144 = vmatprep.subr.mxu0 0.0
  %145 = vmatpush1.msra.mxu0 0.0
  %146 = vmatprep.subr.mxu0 0.0
  %147 = vmatpush1.msra.mxu0 0.0
  %148 = vmatprep.subr.mxu0 0.0
  %149 = vmatpush1.msra.mxu0 0.0
  %150 = vmatprep.subr.mxu0 %v118
  %151 = vmatpush1.msra.mxu0 %v116
  %152 = vmatprep.subr.mxu0 0.0
  %153 = vmatpush2.msra.mxu0 0.0
  %154 = vmatprep.subr.mxu0 0.0
  %155 = vmatpush2.msra.mxu0 0.0
  %156 = vmatprep.subr.mxu0 0.0
  %157 = vmatpush2.msra.mxu0 0.0
  %158 = vmatprep.subr.mxu0 0.0
  %159 = vmatpush2.msra.mxu0 0.0
  %160 = vmatprep.subr.mxu0 0.0
  %161 = vmatpush2.msra.mxu0 0.0
  %162 = vmatprep.subr.mxu0 0.0
  %163 = vmatpush2.msra.mxu0 0.0
  %164 = vmatprep.subr.mxu0 0.0
  %165 = vmatpush2.msra.mxu0 0.0
  %166 = vmatprep.subr.mxu0 0.0
  %167 = vmatpush2.msra.mxu0 0.0
  %168 = vmatprep.subr.mxu0 0.0
  %169 = vmatpush2.msra.mxu0 0.0
  %170 = vmatprep.subr.mxu0 0.0
  %171 = vmatpush2.msra.mxu0 0.0
  %172 = vmatprep.subr.mxu0 0.0
  %173 = vmatpush2.msra.mxu0 0.0
  %174 = vmatprep.subr.mxu0 0.0
  %175 = vmatpush2.msra.mxu0 0.0
  %176 = vmatprep.subr.mxu0 0.0
  %177 = vmatpush2.msra.mxu0 0.0
  %178 = vmatprep.subr.mxu0 0.0
  %179 = vmatpush2.msra.mxu0 0.0
  %180 = vmatprep.subr.mxu0 0.0
  %181 = vmatpush2.msra.mxu0 0.0
  %182 = vmatprep.subr.mxu0 0.0
  %183 = vmatpush2.msra.mxu0 0.0
  %184 = vmatprep.mubr.f32.mxu0 0.0
  %185 = vmatmul.mubr.f32.gmra.mxu0 %v26
  %v186 = vpop.f32.mrf.mxu0
  %v187 = vadd.f32 %v20, %v186
  %v188 = vpop.f32.mrf.mxu0
  %v189 = vadd.f32 %v20, %v188
  %190 = vdwg.mxu0
  %vm191 = vcmp.ge.f32.partialorder %v187, 0.0
  %vm192 = vcmp.ge.f32.partialorder %v189, 0.0
  %v193 = vmul.f32 %v187, 1e-08
  %v194 = vmul.f32 %v189, 1e-08
  %v195 = vsel %vm191, %v187, %v193
  %v196 = vsel %vm192, %v189, %v194
  %s197 = scalar_lea.vmem %s3, 16
  %198 = vst [vmem:[%s197] sm:$0xff] %v195
  %199 = vst [vmem:[%s197 + $0x8] sm:$0xff] %v196
  // Predicated region
  $region14: #{conv_bn_relu.1} parent=0 // pred_check
    _
  $region15: #{conv_bn_relu.1} parent=0 // pred_check_branch
    %201 = sbr.rel (0) target = $region17
  $region16: #{conv_bn_relu.1} parent=0 // pred_region
    _
  $region17: #{conv_bn_relu.1} parent=0 // pred_fallthru
    _
  // Predicated region
  $region18: #{conv_bn_relu.1} parent=0 // pred_check
    _
  $region19: #{conv_bn_relu.1} parent=0 // pred_check_branch
    %203 = sbr.rel (0) target = $region21
  $region20: #{conv_bn_relu.1} parent=0 // pred_region
    _
  $region21: #{conv_bn_relu.1} parent=0 // pred_fallthru
    _

</llo_original>
